<compile_context>
chip_gen: v7x
topology: tpu7x:2x2x1
jax: 0.10.0
libtpu: 0.0.40
codegen_flags: <defaults>
</compile_context>

<pallas_src>
import jax
import jax.numpy as jnp
from jax.experimental import pallas as pl
from jax.experimental.pallas import tpu as pltpu

F_e = 10
F_e_out = 5
F_u = 10
F_xs = 10
F_xt = 2
F_in = F_xs + F_xt + F_e + F_u        # 32

PACK = 4                              # edges packed per 128-lane row
F_in_packed = PACK * F_in             # 128  (one full lane width)
F_out_packed = PACK * F_e_out         # 20

TILE_CAP = 8192                       # packed rows per grid step (upper bound)
MIN_ROWS_PER_STEP = 1024              # below this, per-step overhead dominates
TARGET_STEPS = 8                      # >= 4 steps per TC on v7x when big enough


def _round_up(x, m):
    return ((x + m - 1) // m) * m


def edge_mlp_kernel(h_ref, w1_ref, b1_ref, w2_ref, b2_ref, o_ref):
    # h_ref:  (tile, 128)   packed edge features (bf16 or f32)
    # w1_ref: (128, 20)     block-diag first layer (same dtype as h)
    # b1_ref: (1, 20) f32, w2_ref: (20, 20) f32, b2_ref: (1, 20) f32
    # o_ref:  (tile, 20)
    h = h_ref[...]
    z = jnp.dot(h, w1_ref[...], preferred_element_type=jnp.float32) + b1_ref[...]
    z = jnp.where(z > 0, z, jnp.float32(0.1) * z)          # LeakyReLU(0.1) per spec
    o = jnp.dot(z, w2_ref[...], preferred_element_type=jnp.float32) + b2_ref[...]
    o_ref[...] = o.astype(o_ref.dtype)


def _pack_params(w1, b1, w2, b2):
    """Block-diagonal weights / tiled biases for the PACK-edges-per-row layout."""
    w1_blk = jax.scipy.linalg.block_diag(*([w1] * PACK))   # (128, 20)
    w2_blk = jax.scipy.linalg.block_diag(*([w2] * PACK))   # (20, 20)
    b1_blk = jnp.tile(b1, (1, PACK))                       # (1, 20)
    b2_blk = jnp.tile(b2, (1, PACK))                       # (1, 20)
    return w1_blk, b1_blk, w2_blk, b2_blk


def _choose_tile(E_pack, tile_cap):
    """Packed rows per grid step.

    - at least MIN_ROWS_PER_STEP so the ~0.35 us/step overhead is amortized
      (no artificial ">= 2 steps" split on single-TC v5e/v6e),
    - aim for >= TARGET_STEPS grid steps on large inputs (keeps both v7x
      TensorCores busy with a pipelined multi-step loop each),
    - capped at tile_cap, never bigger than the (padded) input,
    - multiple of 8 sublanes.
    """
    tile = max(MIN_ROWS_PER_STEP, pl.cdiv(E_pack, TARGET_STEPS))
    tile = min(tile, tile_cap, _round_up(E_pack, 8))
    return _round_up(max(tile, 8), 8)


def edge_mlp_pallas(h, w1, b1, w2, b2, *, tile_e=TILE_CAP,
                    input_dtype=jnp.bfloat16, out_dtype=jnp.float32):
    """h: (E, F_in) -> (E, F_e_out).  tile_e caps packed rows (PACK edges each)."""
    E = h.shape[0]
    w1_blk, b1_blk, w2_blk, b2_blk = _pack_params(w1, b1, w2, b2)
    w1_blk = w1_blk.astype(input_dtype)                    # dominant weight read
    b1_blk = b1_blk.astype(jnp.float32)
    w2_blk = w2_blk.astype(jnp.float32)
    b2_blk = b2_blk.astype(jnp.float32)

    # Cast once (no-op if the wrapper already produced input_dtype), then pad
    # in the narrow dtype so the padded copy is also cheap.
    if h.dtype != input_dtype:
        h = h.astype(input_dtype)

    E_pack = _round_up(E, PACK) // PACK                    # packed rows needed
    tile = _choose_tile(E_pack, tile_e)
    E_rows = _round_up(E_pack, tile)
    E_pad = E_rows * PACK
    if E_pad != E:
        h = jnp.pad(h, ((0, E_pad - E), (0, 0)))
    # free row-major reshape: 4 consecutive edges share one 128-lane row
    h_packed = h.reshape(E_rows, F_in_packed)

    grid = (E_rows // tile,)
    out = pl.pallas_call(
        edge_mlp_kernel,
        out_shape=jax.ShapeDtypeStruct((E_rows, F_out_packed), out_dtype),
        grid_spec=pltpu.PrefetchScalarGridSpec(
            num_scalar_prefetch=0,
            grid=grid,
            in_specs=[
                pl.BlockSpec((tile, F_in_packed), lambda i: (i, 0)),
                pl.BlockSpec((F_in_packed, F_out_packed), lambda i: (0, 0)),
                pl.BlockSpec((1, F_out_packed), lambda i: (0, 0)),
                pl.BlockSpec((F_out_packed, F_out_packed), lambda i: (0, 0)),
                pl.BlockSpec((1, F_out_packed), lambda i: (0, 0)),
            ],
            out_specs=pl.BlockSpec((tile, F_out_packed), lambda i: (i, 0)),
        ),
        compiler_params=pltpu.CompilerParams(
            dimension_semantics=("parallel",),
            vmem_limit_bytes=32 * 1024 * 1024,   # v5e default is 16 MiB; be explicit
        ),
    )(h_packed, w1_blk, b1_blk, w2_blk, b2_blk)
    # unpack: row r holds edges 4r..4r+3, each in 5 consecutive lanes
    return out.reshape(E_pad, F_e_out)[:E]


def init_params(key):
    """Deterministic init mimicking torch.nn.Linear defaults (uniform +-1/sqrt(fan_in)).
    Weights stored transposed (in, out) for row-major matmul."""
    k1, k2, k3, k4 = jax.random.split(key, 4)
    bound1 = 1.0 / jnp.sqrt(jnp.float32(F_in))
    bound2 = 1.0 / jnp.sqrt(jnp.float32(F_e_out))
    w1 = jax.random.uniform(k1, (F_in, F_e_out), jnp.float32, -bound1, bound1)
    b1 = jax.random.uniform(k2, (1, F_e_out), jnp.float32, -bound1, bound1)
    w2 = jax.random.uniform(k3, (F_e_out, F_e_out), jnp.float32, -bound2, bound2)
    b2 = jax.random.uniform(k4, (1, F_e_out), jnp.float32, -bound2, bound2)
    return w1, b1, w2, b2


def edge_model_out_forward(params, x_s, x_t, edge_index, edge_attr, u, batch_e,
                           *, tile_e=TILE_CAP, input_dtype=jnp.bfloat16):
    src, tgt = edge_index[0], edge_index[1]
    # gather + concat (plain-JAX glue), materialized directly in the kernel's
    # input dtype — no intermediate f32 pass over h in HBM.
    # TODO(synk): fuse this gather+concat into the kernel via scalar prefetch.
    h = jnp.concatenate(
        [x_s[src], x_t[tgt], edge_attr, u[batch_e]], axis=-1).astype(input_dtype)
    w1, b1, w2, b2 = params
    return edge_mlp_pallas(h, w1, b1, w2, b2, tile_e=tile_e, input_dtype=input_dtype)


def edge_model_out_ref(params, x_s, x_t, edge_index, edge_attr, u, batch_e):
    src, tgt = edge_index[0], edge_index[1]
    h = jnp.concatenate(
        [x_s[src], x_t[tgt], edge_attr, u[batch_e]], axis=-1).astype(jnp.float32)
    w1, b1, w2, b2 = params
    z = h @ w1 + b1
    z = jnp.where(z > 0, z, 0.1 * z)
    return z @ w2 + b2


def _make_graph(key, N_s, N_t, E, B):
    k1, k2, k3, k4, k5, k6 = jax.random.split(key, 6)
    x_s = jax.random.normal(k1, (N_s, F_xs), jnp.float32)
    x_t = jax.random.normal(k2, (N_t, F_xt), jnp.float32)
    edge_attr = jax.random.normal(k3, (E, F_e), jnp.float32)
    u = jax.random.normal(k4, (B, F_u), jnp.float32)
    src = jax.random.randint(k5, (E,), 0, N_s)
    tgt = jax.random.randint(k6, (E,), 0, N_t)
    edge_index = jnp.stack([src, tgt], axis=0)              # (2, E)
    batch_e = jax.random.randint(k1, (E,), 0, B).astype(jnp.int32)
    return x_s, x_t, edge_index, edge_attr, u, batch_e


if __name__ == "__main__":
    key = jax.random.PRNGKey(0)
    kp, kg1, kg2 = jax.random.split(key, 3)
    params = init_params(kp)

    # --- small graph (matches module spec sizes): 6 src / 6 tgt nodes, 8 edges, batch 2
    g_small = _make_graph(kg1, 6, 6, 8, 2)
    ref_small = edge_model_out_ref(params, *g_small)

    # f32 path: tight check of the packed/block-diag kernel math
    out_f32 = edge_model_out_forward(params, *g_small, input_dtype=jnp.float32)
    out_f32 = jax.block_until_ready(out_f32)
    assert out_f32.shape == (8, F_e_out)
    assert jnp.allclose(out_f32, ref_small, atol=1e-4, rtol=1e-4)

    # bf16 transfer path (default): loose tolerance per reduced input precision
    out_bf16 = edge_model_out_forward(params, *g_small)
    out_bf16 = jax.block_until_ready(out_bf16)
    assert out_bf16.shape == (8, F_e_out)
    assert jnp.allclose(out_bf16, ref_small, atol=5e-2, rtol=5e-2)

    # --- larger graph to exercise the multi-step pipelined grid (>= 2 tiles)
    g_big = _make_graph(kg2, 512, 512, 40000, 8)
    ref_big = edge_model_out_ref(params, *g_big)
    out_big = edge_model_out_forward(params, *g_big)
    out_big = jax.block_until_ready(out_big)
    assert out_big.shape == (40000, F_e_out)
    assert jnp.allclose(out_big, ref_big, atol=5e-2, rtol=5e-2)

    print("KERNEL_OK")
</pallas_src>

<mosaic_0001>
module attributes {stable_mosaic.version = 11 : i64} {
  func.func @edge_mlp_kernel(%arg0: i32, %arg1: memref<8x128xf32, #tpu.memory_space<vmem>>, %arg2: memref<128x20xf32, #tpu.memory_space<vmem>>, %arg3: memref<1x20xf32, #tpu.memory_space<vmem>>, %arg4: memref<20x20xf32, #tpu.memory_space<vmem>>, %arg5: memref<1x20xf32, #tpu.memory_space<vmem>>, %arg6: memref<8x20xf32, #tpu.memory_space<vmem>>) attributes {dimension_semantics = [#tpu.dimension_semantics<parallel>], iteration_bounds = array<i64: 1>, scalar_prefetch = 0 : i64, scratch_operands = 0 : i64, tpu.core_type = #tpu.core_type<tc>, window_params = [{transform_indices = @transform_0, window_bounds = array<i64: 8, 128>}, {pipeline_mode = #tpu.pipeline_mode<synchronous>, transform_indices = @transform_1, window_bounds = array<i64: 128, 20>}, {pipeline_mode = #tpu.pipeline_mode<synchronous>, transform_indices = @transform_2, window_bounds = array<i64: 1, 20>}, {pipeline_mode = #tpu.pipeline_mode<synchronous>, transform_indices = @transform_3, window_bounds = array<i64: 20, 20>}, {pipeline_mode = #tpu.pipeline_mode<synchronous>, transform_indices = @transform_4, window_bounds = array<i64: 1, 20>}, {transform_indices = @transform_5, window_bounds = array<i64: 8, 20>}]} {
    %c0 = arith.constant 0 : index
    %c0_0 = arith.constant 0 : index
    %0 = vector.load %arg1[%c0, %c0_0] : memref<8x128xf32, #tpu.memory_space<vmem>>, vector<8x128xf32>
    %c0_1 = arith.constant 0 : index
    %c0_2 = arith.constant 0 : index
    %1 = vector.load %arg2[%c0_1, %c0_2] : memref<128x20xf32, #tpu.memory_space<vmem>>, vector<128x20xf32>
    %cst = arith.constant dense<0.000000e+00> : vector<8x20xf32>
    %2 = tpu.matmul %0, %1, %cst {dimension_numbers = #tpu.dot_dimension_numbers<[1], [0], [0], [1], [0, 0, 1, 1], [], []>} : vector<8x128xf32>, vector<128x20xf32>, vector<8x20xf32> -> vector<8x20xf32>
    %c0_3 = arith.constant 0 : index
    %c0_4 = arith.constant 0 : index
    %3 = vector.load %arg3[%c0_3, %c0_4] : memref<1x20xf32, #tpu.memory_space<vmem>>, vector<1x20xf32>
    %4 = vector.broadcast %3 : vector<1x20xf32> to vector<8x20xf32>
    %5 = arith.addf %2, %4 : vector<8x20xf32>
    %cst_5 = arith.constant 0.000000e+00 : f32
    %6 = vector.broadcast %cst_5 : f32 to vector<8x20xf32>
    %7 = arith.cmpf ogt, %5, %6 : vector<8x20xf32>
    %cst_6 = arith.constant 1.000000e-01 : f32
    %8 = vector.broadcast %cst_6 : f32 to vector<8x20xf32>
    %9 = arith.mulf %8, %5 : vector<8x20xf32>
    %10 = arith.select %7, %5, %9 : vector<8x20xi1>, vector<8x20xf32>
    %c0_7 = arith.constant 0 : index
    %c0_8 = arith.constant 0 : index
    %11 = vector.load %arg4[%c0_7, %c0_8] : memref<20x20xf32, #tpu.memory_space<vmem>>, vector<20x20xf32>
    %cst_9 = arith.constant dense<0.000000e+00> : vector<8x20xf32>
    %12 = tpu.matmul %10, %11, %cst_9 {dimension_numbers = #tpu.dot_dimension_numbers<[1], [0], [0], [1], [0, 0, 1, 1], [], []>} : vector<8x20xf32>, vector<20x20xf32>, vector<8x20xf32> -> vector<8x20xf32>
    %c0_10 = arith.constant 0 : index
    %c0_11 = arith.constant 0 : index
    %13 = vector.load %arg5[%c0_10, %c0_11] : memref<1x20xf32, #tpu.memory_space<vmem>>, vector<1x20xf32>
    %14 = vector.broadcast %13 : vector<1x20xf32> to vector<8x20xf32>
    %15 = arith.addf %12, %14 : vector<8x20xf32>
    %c0_12 = arith.constant 0 : index
    %c0_13 = arith.constant 0 : index
    %16 = vector.load %arg6[%c0_12, %c0_13] : memref<8x20xf32, #tpu.memory_space<vmem>>, vector<8x20xf32>
    tpu.vector_store %arg6[%c0_12, %c0_13], %15 {strides = array<i32>} : memref<8x20xf32, #tpu.memory_space<vmem>>, vector<8x20xf32>,
    return
  }
  func.func @transform_0(%arg0: i32) -> (i32, i32) {
    %c0_i32 = arith.constant 0 : i32
    %c0_i32_0 = arith.constant 0 : i32
    return %arg0, %c0_i32 : i32, i32
  }
  func.func @transform_1(%arg0: i32) -> (i32, i32) {
    %c0_i32 = arith.constant 0 : i32
    %c0_i32_0 = arith.constant 0 : i32
    %c0_i32_1 = arith.constant 0 : i32
    return %c0_i32, %c0_i32_0 : i32, i32
  }
  func.func @transform_2(%arg0: i32) -> (i32, i32) {
    %c0_i32 = arith.constant 0 : i32
    %c0_i32_0 = arith.constant 0 : i32
    %c0_i32_1 = arith.constant 0 : i32
    return %c0_i32, %c0_i32_0 : i32, i32
  }
  func.func @transform_3(%arg0: i32) -> (i32, i32) {
    %c0_i32 = arith.constant 0 : i32
    %c0_i32_0 = arith.constant 0 : i32
    %c0_i32_1 = arith.constant 0 : i32
    return %c0_i32, %c0_i32_0 : i32, i32
  }
  func.func @transform_4(%arg0: i32) -> (i32, i32) {
    %c0_i32 = arith.constant 0 : i32
    %c0_i32_0 = arith.constant 0 : i32
    %c0_i32_1 = arith.constant 0 : i32
    return %c0_i32, %c0_i32_0 : i32, i32
  }
  func.func @transform_5(%arg0: i32) -> (i32, i32) {
    %c0_i32 = arith.constant 0 : i32
    %c0_i32_0 = arith.constant 0 : i32
    return %arg0, %c0_i32 : i32, i32
  }
}

</mosaic_0001>

<llo_original>
// kernel: tpu_custom_call.1
$region0: #{tpu_custom_call.1}
  #allocation0 [shape = 'u32[]', space=smem, size = 0x4, offset = 0x4, fixed_abs, tag = 'smem constant byte address 0x4 - core index']
  #allocation1 [shape = 'u32[144,128]{1,0:T(1,128)}', space=vmem, size = 0x12000, scoped, tag = 'internal scratch']
  %s0 = inlined_call_operand.vmem [shape: f32[8,128], index: 0, kind: input, shape index: {}]
  %s1 = inlined_call_operand.vmem [shape: f32[128,20], index: 1, kind: input, shape index: {}]
  %s2 = inlined_call_operand.vmem [shape: f32[1,20], index: 2, kind: input, shape index: {}]
  %s3 = inlined_call_operand.vmem [shape: f32[20,20], index: 3, kind: input, shape index: {}]
  %s4 = inlined_call_operand.vmem [shape: f32[1,20], index: 4, kind: input, shape index: {}]
  %s5 = inlined_call_operand.hbm [shape: f32[8,20], index: 5, kind: output, shape index: {}]
  %s6 = sld [smem:[#allocation0]]
  $region30: #{tpu_custom_call.1} parent=0
    _
  %s8 = ssub.s32 1, %s6
  %s9 = scalar_select 0, %s8, %s6
  $region1: #{tpu_custom_call.1} parent=0
    #allocation2 [shape = 'u8[4096]{0}', space=vmem, size = 0x1000, scoped, tag = 'output window, operand 0, single buffered']
    #allocation3 [shape = 's32[1]{0}', space=sflag, size = 0x4, scoped, tag = 'scoped memory for tpu_custom_call.1']
    %10 = vsyncpa [#allocation3], 0
    // Predicated region
    $region2: #{tpu_custom_call.1} parent=1 // pred_check
      _
    $region3: #{tpu_custom_call.1} parent=1 // pred_check_branch
      %12 = sbr.rel (0) target = $region5
    $region4: #{tpu_custom_call.1} parent=1 // pred_region
      _
    $region5: #{tpu_custom_call.1} parent=1 // pred_fallthru
      _
    // Predicated region
    $region6: #{tpu_custom_call.1} parent=1 // pred_check
      _
    $region7: #{tpu_custom_call.1} parent=1 // pred_check_branch
      %14 = sbr.rel (0) target = $region9
    $region8: #{tpu_custom_call.1} parent=1 // pred_region
      _
    $region9: #{tpu_custom_call.1} parent=1 // pred_fallthru
      _
    // Predicated region
    $region10: #{tpu_custom_call.1} parent=1 // pred_check
      _
    $region11: #{tpu_custom_call.1} parent=1 // pred_check_branch
      %16 = sbr.rel (0) target = $region13
    $region12: #{tpu_custom_call.1} parent=1 // pred_region
      _
    $region13: #{tpu_custom_call.1} parent=1 // pred_fallthru
      _
    // Predicated region
    $region14: #{tpu_custom_call.1} parent=1 // pred_check
      _
    $region15: #{tpu_custom_call.1} parent=1 // pred_check_branch
      %18 = sbr.rel (0) target = $region17
    $region16: #{tpu_custom_call.1} parent=1 // pred_region
      _
    $region17: #{tpu_custom_call.1} parent=1 // pred_fallthru
      _
    // Predicated region
    $region18: #{tpu_custom_call.1} parent=1 // pred_check
      _
    $region19: #{tpu_custom_call.1} parent=1 // pred_check_branch
      %20 = sbr.rel (0) target = $region21
    $region20: #{tpu_custom_call.1} parent=1 // pred_region
      _
    $region21: #{tpu_custom_call.1} parent=1 // pred_fallthru
      _
    %v21 = vld [vmem:[%s0] sm:$0xff]
    %v22 = vld [vmem:[%s1] sm:$0xff]
    %v23 = vld [vmem:[%s1 + $0x8] sm:$0xff]
    %v24 = vld [vmem:[%s1 + $0x10] sm:$0xff]
    %v25 = vld [vmem:[%s1 + $0x18] sm:$0xff]
    %v26 = vld [vmem:[%s1 + $0x20] sm:$0xff]
    %v27 = vld [vmem:[%s1 + $0x28] sm:$0xff]
    %v28 = vld [vmem:[%s1 + $0x30] sm:$0xff]
    %v29 = vld [vmem:[%s1 + $0x38] sm:$0xff]
    %v30 = vld [vmem:[%s1 + $0x40] sm:$0xff]
    %v31 = vld [vmem:[%s1 + $0x48] sm:$0xff]
    %v32 = vld [vmem:[%s1 + $0x50] sm:$0xff]
    %v33 = vld [vmem:[%s1 + $0x58] sm:$0xff]
    %v34 = vld [vmem:[%s1 + $0x60] sm:$0xff]
    %v35 = vld [vmem:[%s1 + $0x68] sm:$0xff]
    %v36 = vld [vmem:[%s1 + $0x70] sm:$0xff]
    %v37 = vld [vmem:[%s1 + $0x78] sm:$0xff]
    %v38 = vld [vmem:[%s2] sm:$0x1]
    %v40 = vlaneseq
    %v41 = vshrl.u32 %v40, 7
    %v42 = vsub.s32 0, %v41
    %v43 = vrot.slane %v38, %v42
    %45 = vmatprep.subr.mxu0 0.0
    %46 = vmatpush1.msra.mxu0 %v22
    %47 = vmatprep.subr.mxu0 0.0
    %48 = vmatpush1.msra.mxu0 %v23
    %49 = vmatprep.subr.mxu0 0.0
    %50 = vmatpush1.msra.mxu0 %v24
    %51 = vmatprep.subr.mxu0 0.0
    %52 = vmatpush1.msra.mxu0 %v25
    %53 = vmatprep.subr.mxu0 0.0
    %54 = vmatpush1.msra.mxu0 %v26
    %55 = vmatprep.subr.mxu0 0.0
    %56 = vmatpush1.msra.mxu0 %v27
    %57 = vmatprep.subr.mxu0 0.0
    %58 = vmatpush1.msra.mxu0 %v28
    %59 = vmatprep.subr.mxu0 0.0
    %60 = vmatpush1.msra.mxu0 %v29
    %61 = vmatprep.subr.mxu0 0.0
    %62 = vmatpush1.msra.mxu0 %v30
    %63 = vmatprep.subr.mxu0 0.0
    %64 = vmatpush1.msra.mxu0 %v31
    %65 = vmatprep.subr.mxu0 0.0
    %66 = vmatpush1.msra.mxu0 %v32
    %67 = vmatprep.subr.mxu0 0.0
    %68 = vmatpush1.msra.mxu0 %v33
    %69 = vmatprep.subr.mxu0 0.0
    %70 = vmatpush1.msra.mxu0 %v34
    %71 = vmatprep.subr.mxu0 0.0
    %72 = vmatpush1.msra.mxu0 %v35
    %73 = vmatprep.subr.mxu0 0.0
    %74 = vmatpush1.msra.mxu0 %v36
    %75 = vmatprep.subr.mxu0 0.0
    %76 = vmatpush1.msra.mxu0 %v37
    %77 = vmatprep.subr.mxu0 0.0
    %78 = vmatpush1.msra.mxu0 0.0
    %79 = vmatprep.subr.mxu0 0.0
    %80 = vmatpush1.msra.mxu0 0.0
    %81 = vmatprep.subr.mxu0 0.0
    %82 = vmatpush1.msra.mxu0 0.0
    %83 = vmatprep.subr.mxu0 0.0
    %84 = vmatpush1.msra.mxu0 0.0
    %85 = vmatprep.subr.mxu0 0.0
    %86 = vmatpush1.msra.mxu0 0.0
    %87 = vmatprep.subr.mxu0 0.0
    %88 = vmatpush1.msra.mxu0 0.0
    %89 = vmatprep.subr.mxu0 0.0
    %90 = vmatpush1.msra.mxu0 0.0
    %91 = vmatprep.subr.mxu0 0.0
    %92 = vmatpush1.msra.mxu0 0.0
    %93 = vmatprep.subr.mxu0 0.0
    %94 = vmatpush1.msra.mxu0 0.0
    %95 = vmatprep.subr.mxu0 0.0
    %96 = vmatpush1.msra.mxu0 0.0
    %97 = vmatprep.subr.mxu0 0.0
    %98 = vmatpush1.msra.mxu0 0.0
    %99 = vmatprep.subr.mxu0 0.0
    %100 = vmatpush1.msra.mxu0 0.0
    %101 = vmatprep.subr.mxu0 0.0
    %102 = vmatpush1.msra.mxu0 0.0
    %103 = vmatprep.subr.mxu0 0.0
    %104 = vmatpush1.msra.mxu0 0.0
    %105 = vmatprep.subr.mxu0 0.0
    %106 = vmatpush1.msra.mxu0 0.0
    %107 = vmatprep.subr.mxu0 0.0
    %108 = vmatpush1.msra.mxu0 0.0
    %109 = vmatprep.mubr.f32.mxu0 0.0
    %110 = vmatmul.mubr.f32.gmra.mrb[0].mxu0 %v21
    %v111 = vpop.f32.mrb[0].mxu0
    %v112 = vadd.f32 %v43, %v111
    %v113 = vpop.f32.mrb[0].mxu0
    %114 = vdwg.mxu0
    %vm115 = vcmp.gt.f32.partialorder %v112, 0.0
    %v116 = vmul.f32 %v112, 0.1
    %v117 = vsel %vm115, %v112, %v116
    %v118 = vld [vmem:[%s3] sm:$0xff]
    %v119 = vld [vmem:[%s3 + $0x8] sm:$0xff]
    %v120 = vld [vmem:[%s3 + $0x10] sm:$0xf]
    %v121 = vld [vmem:[%s4] sm:$0x1]
    %v123 = vlaneseq
    %v124 = vshrl.u32 %v123, 7
    %v125 = vsub.s32 0, %v124
    %v126 = vrot.slane %v121, %v125
    %vm128 = vcmask 162816
    %v130 = vsel %vm128, %v117, 0
    %vm132 = vcmask 1043456
    %v134 = vsel %vm132, %v120, 0
    %136 = vmatprep.subr.mxu0 0.0
    %137 = vmatpush1.msra.mxu0 %v118
    %138 = vmatprep.subr.mxu0 0.0
    %139 = vmatpush1.msra.mxu0 %v119
    %140 = vmatprep.subr.mxu0 0.0
    %141 = vmatpush1.msra.mxu0 %v134
    %142 = vmatprep.subr.mxu0 0.0
    %143 = vmatpush1.msra.mxu0 0.0
    %144 = vmatprep.subr.mxu0 0.0
    %145 = vmatpush1.msra.mxu0 0.0
    %146 = vmatprep.subr.mxu0 0.0
    %147 = vmatpush1.msra.mxu0 0.0
    %148 = vmatprep.subr.mxu0 0.0
    %149 = vmatpush1.msra.mxu0 0.0
    %150 = vmatprep.subr.mxu0 0.0
    %151 = vmatpush1.msra.mxu0 0.0
    %152 = vmatprep.subr.mxu0 0.0
    %153 = vmatpush1.msra.mxu0 0.0
    %154 = vmatprep.subr.mxu0 0.0
    %155 = vmatpush1.msra.mxu0 0.0
    %156 = vmatprep.subr.mxu0 0.0
    %157 = vmatpush1.msra.mxu0 0.0
    %158 = vmatprep.subr.mxu0 0.0
    %159 = vmatpush1.msra.mxu0 0.0
    %160 = vmatprep.subr.mxu0 0.0
    %161 = vmatpush1.msra.mxu0 0.0
    %162 = vmatprep.subr.mxu0 0.0
    %163 = vmatpush1.msra.mxu0 0.0
    %164 = vmatprep.subr.mxu0 0.0
    %165 = vmatpush1.msra.mxu0 0.0
    %166 = vmatprep.subr.mxu0 0.0
    %167 = vmatpush1.msra.mxu0 0.0
    %168 = vmatprep.subr.mxu0 0.0
    %169 = vmatpush1.msra.mxu0 0.0
    %170 = vmatprep.subr.mxu0 0.0
    %171 = vmatpush1.msra.mxu0 0.0
    %172 = vmatprep.subr.mxu0 0.0
    %173 = vmatpush1.msra.mxu0 0.0
    %174 = vmatprep.subr.mxu0 0.0
    %175 = vmatpush1.msra.mxu0 0.0
    %176 = vmatprep.subr.mxu0 0.0
    %177 = vmatpush1.msra.mxu0 0.0
    %178 = vmatprep.subr.mxu0 0.0
    %179 = vmatpush1.msra.mxu0 0.0
    %180 = vmatprep.subr.mxu0 0.0
    %181 = vmatpush1.msra.mxu0 0.0
    %182 = vmatprep.subr.mxu0 0.0
    %183 = vmatpush1.msra.mxu0 0.0
    %184 = vmatprep.subr.mxu0 0.0
    %185 = vmatpush1.msra.mxu0 0.0
    %186 = vmatprep.subr.mxu0 0.0
    %187 = vmatpush1.msra.mxu0 0.0
    %188 = vmatprep.subr.mxu0 0.0
    %189 = vmatpush1.msra.mxu0 0.0
    %190 = vmatprep.subr.mxu0 0.0
    %191 = vmatpush1.msra.mxu0 0.0
    %192 = vmatprep.subr.mxu0 0.0
    %193 = vmatpush1.msra.mxu0 0.0
    %194 = vmatprep.subr.mxu0 0.0
    %195 = vmatpush1.msra.mxu0 0.0
    %196 = vmatprep.subr.mxu0 0.0
    %197 = vmatpush1.msra.mxu0 0.0
    %198 = vmatprep.subr.mxu0 0.0
    %199 = vmatpush1.msra.mxu0 0.0
    %200 = vmatprep.mubr.f32.mxu0 0.0
    %201 = vmatmul.mubr.f32.gmra.mrb[0].mxu0 %v130
    %v202 = vpop.f32.mrb[0].mxu0
    %v203 = vadd.f32 %v126, %v202
    %v204 = vpop.f32.mrb[0].mxu0
    %205 = vdwg.mxu0
    %206 = vst.msk [vmem:[#allocation2] sm:$0xff] %vm128, %v203
    // Predicated region
    $region22: #{tpu_custom_call.1} parent=1 // pred_check
      _
    $region23: #{tpu_custom_call.1} parent=1 // pred_check_branch
      %208 = sbr.rel (0) target = $region25
    $region24: #{tpu_custom_call.1} parent=1 // pred_region
      %s210 = ssub.s32 128, 128
      %211 = vsyncadd [#allocation3], %s210
      %s213 = sshll.u32 [#allocation2], 4
      %s214 = int_to_ptr.vmem [resolvable:$true] %s213
      %216 = dma.vmem_to_hbm [thread:$0]  %s214, 128, %s5, [#allocation3]
    $region25: #{tpu_custom_call.1} parent=1 // pred_fallthru
      _
    // Predicated region
    $region26: #{tpu_custom_call.1} parent=1 // pred_check
      _
    $region27: #{tpu_custom_call.1} parent=1 // pred_check_branch
      %218 = sbr.rel (0) target = $region29
    $region28: #{tpu_custom_call.1} parent=1 // pred_region
      %219 = dma.done [#allocation3], 128
    $region29: #{tpu_custom_call.1} parent=1 // pred_fallthru
      _
    %220 = vsyncpa [#allocation3], 1

</llo_original>
